<compile_context>
chip_gen: v6e
topology: v6e:2x2x1
jax: 0.10.0
libtpu: 0.0.40
codegen_flags: <defaults>
</compile_context>

<pallas_src>
import jax
import jax.numpy as jnp
from jax import lax
from jax.experimental import pallas as pl
from jax.experimental.pallas import tpu as pltpu


_EPS = 1e-5


def _round_up(v, m):
    return ((v + m - 1) // m) * m


def _round_down(v, m):
    return (v // m) * m


def _vmem_limit_bytes():
    """Generation-aware scoped-VMEM limit (~3/4 of physical, capped at 96 MiB)."""
    cap = None
    try:
        cap = getattr(pltpu.get_tpu_info(), "vmem_capacity_bytes", None)
    except Exception:
        cap = None
    if not cap:
        cap = 64 << 20  # conservative (v7x-sized) fallback
    return int(min((cap * 3) // 4, 96 << 20))


# --------------------------------------------------------------------------
# Fused single-pass kernel: whole batch (N rows) per column tile.
# --------------------------------------------------------------------------
def _bn_fused_kernel(x_ref, g_ref, o_ref):
    x = x_ref[...].astype(jnp.float32)                       # (N, TD)
    inv_n = jnp.float32(1.0 / x.shape[0])
    mean = jnp.sum(x, axis=0, keepdims=True) * inv_n         # (1, TD)
    xc = x - mean
    var = jnp.sum(xc * xc, axis=0, keepdims=True) * inv_n    # biased variance
    scale = lax.rsqrt(var + jnp.float32(_EPS)) * g_ref[0]    # gamma fused in
    o_ref[...] = (xc * scale).astype(o_ref.dtype)


# --------------------------------------------------------------------------
# Tall-batch fallback: pass 1 (column statistics), pass 2 (apply).
# --------------------------------------------------------------------------
def _make_stats_kernel(n_total, block_rows):
    def kernel(x_ref, g_ref, scale_ref, shift_ref, k0_ref):
        k = pl.program_id(1)                                  # N (reduction) axis
        x = x_ref[...].astype(jnp.float32)                    # (BR, TD)

        @pl.when(k == 0)
        def _():
            # Per-column shift (first batch row) tames E[x^2]-mean^2 cancellation.
            k0_ref[...] = x[0:1, :]
            scale_ref[...] = jnp.zeros_like(scale_ref)        # accumulates sum(x-K)
            shift_ref[...] = jnp.zeros_like(shift_ref)        # accumulates sum((x-K)^2)

        row = lax.broadcasted_iota(jnp.int32, (block_rows, 1), 0) + k * block_rows
        valid = row < n_total                                  # mask ragged last row block
        xs = jnp.where(valid, x - k0_ref[...], 0.0)
        scale_ref[...] += jnp.sum(xs, axis=0, keepdims=True)
        shift_ref[...] += jnp.sum(xs * xs, axis=0, keepdims=True)

        @pl.when(k == pl.num_programs(1) - 1)
        def _():
            inv_n = jnp.float32(1.0 / n_total)
            m_s = scale_ref[...] * inv_n                       # shifted mean
            var = jnp.maximum(shift_ref[...] * inv_n - m_s * m_s, 0.0)
            scale = lax.rsqrt(var + jnp.float32(_EPS)) * g_ref[0]
            mean = m_s + k0_ref[...]
            scale_ref[...] = scale
            shift_ref[...] = -mean * scale
    return kernel


def _bn_apply_kernel(x_ref, scale_ref, shift_ref, o_ref):
    x = x_ref[...].astype(jnp.float32)
    o_ref[...] = (x * scale_ref[...] + shift_ref[...]).astype(o_ref.dtype)


# --------------------------------------------------------------------------
# Wrapper
# --------------------------------------------------------------------------
def bn_layer_forward(x, gamma, *, two_pass=None, block_rows=None, block_cols=None):
    """Training-mode BatchNorm1d forward with constant weight `gamma`, bias 0.

    x: (N, D) float32, gamma: scalar -> (N, D) float32.
    two_pass / block_rows / block_cols: optional overrides (testing / tuning).
    """
    N, D = x.shape
    if N < 2:
        # nn.BatchNorm1d raises for batch size 1 in training mode; mirror that.
        raise ValueError("BN_Layer (training mode) requires a batch of >= 2 rows.")

    g = jnp.asarray(gamma, dtype=jnp.float32).reshape((1,))
    vmem_limit = _vmem_limit_bytes()

    # Fused-path VMEM per lane: double-buffered f32 in+out blocks (16*N bytes)
    # plus ~3 f32 temporaries (12*N bytes).
    fused_bytes_per_lane = 28 * N
    min_lanes = min(D, 128)
    if two_pass is None:
        use_fused = fused_bytes_per_lane * min_lanes <= vmem_limit
    else:
        use_fused = not two_pass

    if use_fused:
        # ---------------- fused single-pass path (2 HBM passes) ----------------
        if D <= 128:
            td = D                                   # full-array lane block
        else:
            td = _round_down(vmem_limit // fused_bytes_per_lane, 128)
            td = max(128, min(td, _round_down(D, 128)))
            # Keep >= 2 D-steps when splittable so both v7x TCs get work.
            if td >= D and D >= 256:
                td = _round_up(D // 2, 128)
        grid_d = pl.cdiv(D, td)
        return pl.pallas_call(
            _bn_fused_kernel,
            out_shape=jax.ShapeDtypeStruct((N, D), x.dtype),
            grid=(grid_d,),
            in_specs=[
                pl.BlockSpec((N, td), lambda j: (0, j)),
                pl.BlockSpec(memory_space=pltpu.MemorySpace.SMEM),
            ],
            out_specs=pl.BlockSpec((N, td), lambda j: (0, j)),
            compiler_params=pltpu.CompilerParams(
                dimension_semantics=("parallel",),
                vmem_limit_bytes=vmem_limit,
            ),
            cost_estimate=pl.CostEstimate(
                flops=6 * N * D, transcendentals=D, bytes_accessed=8 * N * D),
        )(x, g)

    # ---------------- tall-batch two-pass path (3 HBM passes) ----------------
    if block_cols is not None:
        td = block_cols
    elif D <= 128:
        td = D
    else:
        td = min(512, _round_down(D, 128))
    if block_rows is not None:
        br = block_rows
    else:
        br = _round_down(max(vmem_limit // (28 * td), 8), 8)
        br = max(8, min(br, _round_up(N, 8)))
    grid_d = pl.cdiv(D, td)
    grid_n = pl.cdiv(N, br)

    scale, shift = pl.pallas_call(
        _make_stats_kernel(N, br),
        out_shape=(jax.ShapeDtypeStruct((1, D), jnp.float32),
                   jax.ShapeDtypeStruct((1, D), jnp.float32)),
        grid=(grid_d, grid_n),
        in_specs=[
            pl.BlockSpec((br, td), lambda j, k: (k, j)),
            pl.BlockSpec(memory_space=pltpu.MemorySpace.SMEM),
        ],
        out_specs=(pl.BlockSpec((1, td), lambda j, k: (0, j)),
                   pl.BlockSpec((1, td), lambda j, k: (0, j))),
        scratch_shapes=[pltpu.VMEM((1, td), jnp.float32)],
        compiler_params=pltpu.CompilerParams(
            dimension_semantics=("parallel", "arbitrary"),
            vmem_limit_bytes=vmem_limit,
        ),
        cost_estimate=pl.CostEstimate(
            flops=5 * N * D, transcendentals=D, bytes_accessed=4 * N * D),
    )(x, g)

    return pl.pallas_call(
        _bn_apply_kernel,
        out_shape=jax.ShapeDtypeStruct((N, D), x.dtype),
        grid=(grid_d, grid_n),
        in_specs=[
            pl.BlockSpec((br, td), lambda j, k: (k, j)),
            pl.BlockSpec((1, td), lambda j, k: (0, j)),
            pl.BlockSpec((1, td), lambda j, k: (0, j)),
        ],
        out_specs=pl.BlockSpec((br, td), lambda j, k: (k, j)),
        compiler_params=pltpu.CompilerParams(
            dimension_semantics=("parallel", "parallel"),
            vmem_limit_bytes=vmem_limit,
        ),
        cost_estimate=pl.CostEstimate(
            flops=2 * N * D, transcendentals=0, bytes_accessed=8 * N * D),
    )(x, scale, shift)


def make_bn_layer_gamma(tau=0.5, mu=True):
    """Constant BN weight value mirroring BN_Layer.__init__ (theta = 0.5)."""
    theta = jnp.float32(0.5)
    tau = jnp.float32(tau)
    gamma1 = jnp.sqrt(tau + (1.0 - tau) * jax.nn.sigmoid(theta))
    gamma2 = jnp.sqrt((1.0 - tau) * jax.nn.sigmoid(-theta))
    return gamma1 if mu else gamma2


if __name__ == "__main__":
    def reference(x, gamma):
        mean = jnp.mean(x, axis=0, keepdims=True)
        var = jnp.mean((x - mean) ** 2, axis=0, keepdims=True)
        return (x - mean) / jnp.sqrt(var + _EPS) * gamma   # bias frozen at 0

    key = jax.random.PRNGKey(0)
    k1, k2, k3 = jax.random.split(key, 3)
    gamma = make_bn_layer_gamma(tau=0.5, mu=True)

    # 1) Module-sized case (dim_z=32, batch=8): fused single-pass path.
    x1 = jax.random.normal(k1, (8, 32), dtype=jnp.float32)
    out1 = bn_layer_forward(x1, gamma)
    jax.block_until_ready(out1)
    assert out1.shape == x1.shape
    assert jnp.allclose(out1, reference(x1, gamma), atol=1e-4, rtol=1e-5)

    # 2) Ragged D (not a multiple of 128), nonzero mean: fused path with a
    #    masked partial last block and no wrapper pad/slice.
    x2 = jax.random.normal(k2, (16, 200), dtype=jnp.float32) * 2.0 + 3.0
    out2 = bn_layer_forward(x2, gamma)
    jax.block_until_ready(out2)
    assert jnp.allclose(out2, reference(x2, gamma), atol=1e-4, rtol=1e-4)

    # 3) Forced tall-batch two-pass path with ragged row/column blocks.
    x3 = jax.random.normal(k3, (40, 200), dtype=jnp.float32) * 0.5 - 1.0
    out3 = bn_layer_forward(x3, gamma, two_pass=True, block_rows=16, block_cols=128)
    jax.block_until_ready(out3)
    assert jnp.allclose(out3, reference(x3, gamma), atol=1e-4, rtol=1e-4)

    print("KERNEL_OK")
</pallas_src>

<mosaic_0001>
module attributes {stable_mosaic.version = 11 : i64} {
  func.func @_bn_fused_kernel(%arg0: i32, %arg1: memref<8x32xf32, #tpu.memory_space<vmem>>, %arg2: memref<1xf32, #tpu.memory_space<smem>>, %arg3: memref<8x32xf32, #tpu.memory_space<vmem>>) attributes {dimension_semantics = [#tpu.dimension_semantics<parallel>], iteration_bounds = array<i64: 1>, scalar_prefetch = 0 : i64, scratch_operands = 0 : i64, tpu.core_type = #tpu.core_type<tc>, window_params = [{transform_indices = @transform_0, window_bounds = array<i64: 8, 32>}, {transform_indices = @transform_1, window_bounds = array<i64: 1>}, {transform_indices = @transform_2, window_bounds = array<i64: 8, 32>}]} {
    %c0 = arith.constant 0 : index
    %c0_0 = arith.constant 0 : index
    %0 = vector.load %arg1[%c0, %c0_0] : memref<8x32xf32, #tpu.memory_space<vmem>>, vector<8x32xf32>
    %cst = arith.constant dense<0.000000e+00> : vector<32xf32>
    %1 = vector.multi_reduction <add>, %0, %cst [0] : vector<8x32xf32> to vector<32xf32>
    %2 = vector.shape_cast %1 : vector<32xf32> to vector<1x32xf32>
    %cst_1 = arith.constant 1.250000e-01 : f32
    %3 = vector.broadcast %cst_1 : f32 to vector<1x32xf32>
    %4 = arith.mulf %2, %3 : vector<1x32xf32>
    %5 = vector.broadcast %4 : vector<1x32xf32> to vector<8x32xf32>
    %6 = arith.subf %0, %5 : vector<8x32xf32>
    %7 = arith.mulf %6, %6 : vector<8x32xf32>
    %cst_2 = arith.constant dense<0.000000e+00> : vector<32xf32>
    %8 = vector.multi_reduction <add>, %7, %cst_2 [0] : vector<8x32xf32> to vector<32xf32>
    %9 = vector.shape_cast %8 : vector<32xf32> to vector<1x32xf32>
    %cst_3 = arith.constant 1.250000e-01 : f32
    %10 = vector.broadcast %cst_3 : f32 to vector<1x32xf32>
    %11 = arith.mulf %9, %10 : vector<1x32xf32>
    %cst_4 = arith.constant 9.99999974E-6 : f32
    %12 = vector.broadcast %cst_4 : f32 to vector<1x32xf32>
    %13 = arith.addf %11, %12 : vector<1x32xf32>
    %14 = math.rsqrt %13 : vector<1x32xf32>
    %c0_5 = arith.constant 0 : index
    %15 = memref.load %arg2[%c0_5] : memref<1xf32, #tpu.memory_space<smem>>
    %16 = vector.broadcast %15 : f32 to vector<1x32xf32>
    %17 = arith.mulf %14, %16 : vector<1x32xf32>
    %18 = vector.broadcast %17 : vector<1x32xf32> to vector<8x32xf32>
    %19 = arith.mulf %6, %18 : vector<8x32xf32>
    %c0_6 = arith.constant 0 : index
    %c0_7 = arith.constant 0 : index
    %20 = vector.load %arg3[%c0_6, %c0_7] : memref<8x32xf32, #tpu.memory_space<vmem>>, vector<8x32xf32>
    tpu.vector_store %arg3[%c0_6, %c0_7], %19 {strides = array<i32>} : memref<8x32xf32, #tpu.memory_space<vmem>>, vector<8x32xf32>,
    return
  }
  func.func @transform_0(%arg0: i32) -> (i32, i32) {
    %c0_i32 = arith.constant 0 : i32
    %c0_i32_0 = arith.constant 0 : i32
    return %c0_i32, %arg0 : i32, i32
  }
  func.func @transform_1(%arg0: i32) -> i32 {
    %c0_i32 = arith.constant 0 : i32
    %c0_i32_0 = arith.constant 0 : i32
    return %c0_i32 : i32
  }
  func.func @transform_2(%arg0: i32) -> (i32, i32) {
    %c0_i32 = arith.constant 0 : i32
    %c0_i32_0 = arith.constant 0 : i32
    return %c0_i32, %arg0 : i32, i32
  }
}

</mosaic_0001>

<llo_original>
// kernel: tpu_custom_call.1
$region0: #{tpu_custom_call.1}
  #allocation0 [shape = 'u32[]', space=smem, size = 0x4, offset = 0x4, fixed_abs, tag = 'smem constant byte address 0x4 - core index']
  #allocation1 [shape = 'u32[144,128]{1,0:T(1,128)}', space=vmem, size = 0x12000, scoped, tag = 'internal scratch']
  #allocation2 [shape = 'f32[1]{0:T(128)S(6)}', space=smem, size = 0x200, scoped, tag = 'scoped memory for tpu_custom_call.1']
  %s0 = inlined_call_operand.hbm [shape: f32[8,32], index: 0, kind: input, shape index: {}]
  %s1 = inlined_call_operand.<no memory space> [shape: f32[1], index: 1, kind: input, shape index: {}]
  %s2 = inlined_call_operand.hbm [shape: f32[8,32], index: 2, kind: output, shape index: {}]
  %s3 = sld [smem:[#allocation0]]
  $region22: #{tpu_custom_call.1} parent=0
    _
  %s5 = ssub.s32 1, %s3
  %s6 = scalar_select 0, %s5, %s3
  %7 = sst [smem:[#allocation2]] %s1
  $region1: #{tpu_custom_call.1} parent=0
    #allocation3 [shape = 'u8[4096]{0}', space=vmem, size = 0x1000, scoped, tag = 'input window, operand 0, single buffered']
    #allocation4 [shape = 's32[1]{0}', space=sflag, size = 0x4, scoped, tag = 'scoped memory for tpu_custom_call.1']
    #allocation5 [shape = 's32[1]{0}', space=sflag, size = 0x4, scoped, tag = 'scoped memory for tpu_custom_call.1']
    #allocation6 [shape = 'u8[4096]{0}', space=vmem, size = 0x1000, scoped, tag = 'output window, operand 0, single buffered']
    %8 = vsyncpa [#allocation4], 0
    %9 = vsyncpa [#allocation5], 0
    // Predicated region
    $region2: #{tpu_custom_call.1} parent=1 // pred_check
      _
    $region3: #{tpu_custom_call.1} parent=1 // pred_check_branch
      %11 = sbr.rel (0) target = $region5
    $region4: #{tpu_custom_call.1} parent=1 // pred_region
      %s13 = ssub.s32 128, 128
      %14 = vsyncadd [#allocation4], %s13
      %s16 = sshll.u32 [#allocation3], 4
      %s17 = int_to_ptr.vmem [resolvable:$true] %s16
      %19 = dma.hbm_to_vmem [thread:$0]  %s0, 128, %s17, [#allocation4]
    $region5: #{tpu_custom_call.1} parent=1 // pred_fallthru
      _
    // Predicated region
    $region6: #{tpu_custom_call.1} parent=1 // pred_check
      _
    $region7: #{tpu_custom_call.1} parent=1 // pred_check_branch
      %21 = sbr.rel (0) target = $region9
    $region8: #{tpu_custom_call.1} parent=1 // pred_region
      _
    $region9: #{tpu_custom_call.1} parent=1 // pred_fallthru
      _
    // Predicated region
    $region10: #{tpu_custom_call.1} parent=1 // pred_check
      _
    $region11: #{tpu_custom_call.1} parent=1 // pred_check_branch
      %23 = sbr.rel (0) target = $region13
    $region12: #{tpu_custom_call.1} parent=1 // pred_region
      %24 = dma.done [#allocation4], 128
    $region13: #{tpu_custom_call.1} parent=1 // pred_fallthru
      _
    %v25 = vld [vmem:[#allocation3] sm:$0xff]
    %vm26 = vcmask 261120
    %v27 = vsel %vm26, %v25, 0.0
    %v28 = vrot.slane %v27, 4
    %v29 = vadd.f32 %v27, %v28
    %v30 = vrot.slane %v29, 2
    %v31 = vadd.f32 %v29, %v30
    %v32 = vrot.slane %v31, 1
    %v33 = vadd.f32 %v31, %v32
    %v34 = vmul.f32 %v33, 0.125
    %v35 = vsub.f32 %v25, %v34
    %v36 = vmul.f32 %v35, %v35
    %v37 = vsel %vm26, %v36, 0.0
    %v38 = vrot.slane %v37, 4
    %v39 = vadd.f32 %v37, %v38
    %v40 = vrot.slane %v39, 2
    %v41 = vadd.f32 %v39, %v40
    %v42 = vrot.slane %v41, 1
    %v43 = vadd.f32 %v41, %v42
    %v44 = vmul.f32 %v43, 0.125
    %v45 = vadd.f32 %v44, 1e-05
    %v46 = vrsqrt.pop %v45
    %s47 = sld [smem:[#allocation2]]
    %v48 = vstv %s47
    %v49 = vmul.f32 %v46, %v48
    %v50 = vmul.f32 %v35, %v49
    %51 = vst.msk [vmem:[#allocation6] sm:$0xff] %vm26, %v50
    // Predicated region
    $region14: #{tpu_custom_call.1} parent=1 // pred_check
      _
    $region15: #{tpu_custom_call.1} parent=1 // pred_check_branch
      %53 = sbr.rel (0) target = $region17
    $region16: #{tpu_custom_call.1} parent=1 // pred_region
      %s55 = ssub.s32 128, 128
      %56 = vsyncadd [#allocation5], %s55
      %s58 = sshll.u32 [#allocation6], 4
      %s59 = int_to_ptr.vmem [resolvable:$true] %s58
      %61 = dma.vmem_to_hbm [thread:$0]  %s59, 128, %s2, [#allocation5]
    $region17: #{tpu_custom_call.1} parent=1 // pred_fallthru
      _
    // Predicated region
    $region18: #{tpu_custom_call.1} parent=1 // pred_check
      _
    $region19: #{tpu_custom_call.1} parent=1 // pred_check_branch
      %63 = sbr.rel (0) target = $region21
    $region20: #{tpu_custom_call.1} parent=1 // pred_region
      %64 = dma.done [#allocation5], 128
    $region21: #{tpu_custom_call.1} parent=1 // pred_fallthru
      _
    %65 = vsyncpa [#allocation4], 1
    %66 = vsyncpa [#allocation5], 1

</llo_original>
